<compile_context>
chip_gen: v7x
topology: tpu7x:2x2x1
jax: 0.10.0
libtpu: 0.0.40
codegen_flags: <defaults>
</compile_context>

<pallas_src>
import functools

import jax
import jax.numpy as jnp
from jax.experimental import pallas as pl
from jax.experimental.pallas import tpu as pltpu


# ---------------------------------------------------------------------------
# Kernel bodies
# ---------------------------------------------------------------------------

def _partial_product(x_ref, w1_ref, b1_ref, w2_ref):
    """ReLU(x @ W1_k + b1_k) @ W2_k for the current hidden slice (f32)."""
    h = jnp.dot(x_ref[...], w1_ref[...], preferred_element_type=jnp.float32)
    # Elementwise math in f32 (v5e VPU has no bf16 path).
    h = jnp.maximum(h + b1_ref[...].astype(jnp.float32), 0.0)
    # nn.Dropout == identity in eval mode.
    return jnp.dot(h.astype(w2_ref.dtype), w2_ref[...],
                   preferred_element_type=jnp.float32)


def _ffn_kernel_out_acc(x_ref, w1_ref, b1_ref, w2_ref, b2_ref, o_ref):
    """f32-output variant: accumulate directly into the VMEM-resident o_ref."""
    k = pl.program_id(1)
    nk = pl.num_programs(1)
    p = _partial_product(x_ref, w1_ref, b1_ref, w2_ref)

    @pl.when(k == 0)
    def _():
        o_ref[...] = p                                   # plain store, no RMW

    @pl.when(jnp.logical_and(k > 0, k < nk - 1))
    def _():
        o_ref[...] += p

    @pl.when(jnp.logical_and(k == nk - 1, k > 0))        # fused epilogue
    def _():
        o_ref[...] += p + b2_ref[...].astype(jnp.float32)

    @pl.when(jnp.logical_and(k == nk - 1, k == 0))       # single-k-step case
    def _():
        o_ref[...] += b2_ref[...].astype(jnp.float32)


def _ffn_kernel_scratch_acc(x_ref, w1_ref, b1_ref, w2_ref, b2_ref, o_ref,
                            acc_ref):
    """Non-f32-output variant: f32 VMEM accumulator, cast once at the end."""
    k = pl.program_id(1)
    nk = pl.num_programs(1)
    p = _partial_product(x_ref, w1_ref, b1_ref, w2_ref)

    @pl.when(k == 0)
    def _():
        acc_ref[...] = p

    @pl.when(jnp.logical_and(k > 0, k < nk - 1))
    def _():
        acc_ref[...] += p

    @pl.when(jnp.logical_and(k == nk - 1, k > 0))        # fused epilogue
    def _():
        o_ref[...] = (acc_ref[...] + p
                      + b2_ref[...].astype(jnp.float32)).astype(o_ref.dtype)

    @pl.when(jnp.logical_and(k == nk - 1, k == 0))       # single-k-step case
    def _():
        o_ref[...] = (p + b2_ref[...].astype(jnp.float32)).astype(o_ref.dtype)


# ---------------------------------------------------------------------------
# Generation-aware tiling
# ---------------------------------------------------------------------------

def _chip_profile():
    """Return (vmem_budget_bytes, target_row_tile, multi_core_chip)."""
    kind = ""
    try:
        kind = jax.devices()[0].device_kind.lower()
    except Exception:
        pass
    vmem = None
    try:
        vmem = int(pltpu.get_tpu_info().vmem_capacity_bytes)
    except Exception:
        vmem = None
    if vmem is None:
        vmem = (64 << 20) if "v7" in kind else (128 << 20)
    if vmem <= (64 << 20) or "v7" in kind:
        # v7x-class: 64 MiB/TC, 3.2 TB/s HBM, 2 TCs.  tm~512 clears the ridge.
        return 48 << 20, 512, True
    if "v6" in kind:
        # v6e: 128 MiB VMEM, worst HBM-BW-to-FLOP ratio -> largest row tiles.
        return 100 << 20, 1024, False
    # v5e and other 128 MiB chips.
    return 96 << 20, 512, False


def _footprint(tm, tk, d_model, x_bytes, w_bytes, out_bytes, use_scratch_acc):
    fp = (2 * tm * d_model * x_bytes          # double-buffered x tiles
          + 2 * tm * d_model * out_bytes      # double-buffered out tiles
          + 2 * d_model * tk * w_bytes        # w1 tiles
          + 2 * tk * 4                        # b1 tiles
          + 2 * tk * d_model * w_bytes        # w2 tiles
          + 2 * d_model * 4)                  # b2
    if use_scratch_acc:
        fp += tm * d_model * 4                # f32 accumulator scratch
    return fp


def _pick_tiles(M, d_model, hidden, x_bytes, w_bytes, out_bytes,
                use_scratch_acc, budget, tm_target):
    pipeline_budget = budget - (6 << 20)      # headroom for internal scratch

    # Candidate hidden tiles: divisors of `hidden` only (never feed padded
    # garbage hidden columns into the reduction), largest first.
    tk_cands = sorted({c for c in (2048, 1536, 1024, 768, 512, 384, 256, 128)
                       if c < hidden and hidden % c == 0} | {hidden},
                      reverse=True)

    tm = min(tm_target, M)
    tk = None
    while True:
        tk = next((c for c in tk_cands
                   if _footprint(tm, c, d_model, x_bytes, w_bytes, out_bytes,
                                 use_scratch_acc) <= pipeline_budget), None)
        if tk is not None or tm <= 256:
            break
        tm = max(256, ((tm // 2) + 127) // 128 * 128)
    if tk is None:
        tk = tk_cands[-1]
    return tm, tk


# ---------------------------------------------------------------------------
# Public wrapper
# ---------------------------------------------------------------------------

@functools.partial(jax.jit,
                   static_argnames=("tm", "tk", "compute_dtype",
                                    "weight_buffers"))
def feed_forward(x, w1, b1, w2, b2, *, tm=None, tk=None, compute_dtype=None,
                 weight_buffers=2):
    """x: [..., d_model] -> [..., d_model].  Eval-mode FeedForward forward."""
    orig_shape = x.shape
    d_model = orig_shape[-1]
    hidden = w1.shape[1]
    x2 = x.reshape(-1, d_model)
    M = x2.shape[0]

    out_dtype = x.dtype
    if compute_dtype is not None:
        x2 = x2.astype(compute_dtype)
        w1 = w1.astype(compute_dtype)
        w2 = w2.astype(compute_dtype)
    b1 = b1.reshape(1, hidden)
    b2 = b2.reshape(1, d_model)

    use_scratch_acc = jnp.dtype(out_dtype) != jnp.dtype(jnp.float32)
    x_bytes = jnp.dtype(x2.dtype).itemsize
    w_bytes = jnp.dtype(w1.dtype).itemsize
    out_bytes = jnp.dtype(out_dtype).itemsize

    budget, tm_target, multi_core = _chip_profile()
    auto_tm, auto_tk = _pick_tiles(M, d_model, hidden, x_bytes, w_bytes,
                                   out_bytes, use_scratch_acc, budget,
                                   tm_target)
    # On 2-TC chips keep the parallel (row) axis at least 2-wide when possible
    # so both TensorCores get work.
    if multi_core and M > 256 and pl.cdiv(M, auto_tm) < 2:
        auto_tm = max(128, ((pl.cdiv(M, 2) + 127) // 128) * 128)
    tm = auto_tm if tm is None else tm
    tk = auto_tk if tk is None else tk

    # Row padding is safe (padded output rows are clipped on writeback), but a
    # padded hidden tail would accumulate garbage -> require exact divisibility.
    assert hidden % tk == 0, f"hidden tile {tk} must divide hidden {hidden}"

    n_row = pl.cdiv(M, tm)
    grid = (n_row, hidden // tk)

    fp = _footprint(tm, tk, d_model, x_bytes, w_bytes, out_bytes,
                    use_scratch_acc)
    vmem_limit = int(min(budget, max(32 << 20, fp + fp // 2 + (4 << 20))))

    # True HBM traffic: weights are re-streamed once per row tile.
    cost = pl.CostEstimate(
        flops=4 * M * d_model * hidden,
        transcendentals=0,
        bytes_accessed=(x2.size * x_bytes + M * d_model * out_bytes
                        + n_row * (w1.size * w_bytes + w2.size * w_bytes
                                   + b1.size * jnp.dtype(b1.dtype).itemsize
                                   + b2.size * jnp.dtype(b2.dtype).itemsize)))

    def _weight_spec(shape, index_map):
        if weight_buffers != 2:
            return pl.BlockSpec(shape, index_map,
                                pipeline_mode=pl.Buffered(weight_buffers))
        return pl.BlockSpec(shape, index_map)

    if use_scratch_acc:
        kernel = _ffn_kernel_scratch_acc
        scratch = [pltpu.VMEM((tm, d_model), jnp.float32)]
    else:
        kernel = _ffn_kernel_out_acc
        scratch = []

    out2 = pl.pallas_call(
        kernel,
        out_shape=jax.ShapeDtypeStruct((M, d_model), out_dtype),
        grid_spec=pltpu.PrefetchScalarGridSpec(
            num_scalar_prefetch=0,
            grid=grid,
            in_specs=[
                pl.BlockSpec((tm, d_model), lambda i, k: (i, 0)),   # x rows
                _weight_spec((d_model, tk), lambda i, k: (0, k)),   # w1 slice
                pl.BlockSpec((1, tk),       lambda i, k: (0, k)),   # b1 slice
                _weight_spec((tk, d_model), lambda i, k: (k, 0)),   # w2 slice
                pl.BlockSpec((1, d_model),  lambda i, k: (0, 0)),   # b2
            ],
            out_specs=pl.BlockSpec((tm, d_model), lambda i, k: (i, 0)),
            scratch_shapes=scratch,
        ),
        compiler_params=pltpu.CompilerParams(
            dimension_semantics=("parallel", "arbitrary"),
            vmem_limit_bytes=vmem_limit),
        cost_estimate=cost,
    )(x2, w1, b1, w2, b2)

    return out2.reshape(orig_shape)


def _init_params(key, d_model, hidden):
    """Deterministic init mimicking nn.Linear's uniform(-1/sqrt(fan_in), +)."""
    k1, k2, k3, k4 = jax.random.split(key, 4)
    lim1 = 1.0 / jnp.sqrt(jnp.float32(d_model))
    lim2 = 1.0 / jnp.sqrt(jnp.float32(hidden))
    # stored transposed vs. PyTorch (out,in) -> (in,out)
    w1 = jax.random.uniform(k1, (d_model, hidden), jnp.float32, -lim1, lim1)
    b1 = jax.random.uniform(k2, (1, hidden), jnp.float32, -lim1, lim1)
    w2 = jax.random.uniform(k3, (hidden, d_model), jnp.float32, -lim2, lim2)
    b2 = jax.random.uniform(k4, (1, d_model), jnp.float32, -lim2, lim2)
    return w1, b1, w2, b2


if __name__ == "__main__":
    # Small demo shapes: batch=2, seq=8, d_model=32, hidden=64.
    # (Real deployments should present d_model as a multiple of 128 for
    #  lane-dense stores; small demo uses full-dim blocks, which are legal.)
    batch, seq, d_model, hidden = 2, 8, 32, 64
    key = jax.random.PRNGKey(0)
    kx, kp = jax.random.split(key)

    x = jax.random.normal(kx, (batch, seq, d_model), jnp.float32)
    w1, b1, w2, b2 = _init_params(kp, d_model, hidden)

    # pure-JAX reference (eval-mode FeedForward)
    ref = jnp.maximum(x @ w1 + b1[0], 0.0) @ w2 + b2[0]

    # f32 path (accumulates directly into the output block)
    out = feed_forward(x, w1, b1, w2, b2)
    jax.block_until_ready(out)
    assert out.shape == x.shape
    assert jnp.allclose(out, ref, atol=1e-5, rtol=1e-5), "f32 mismatch vs ref"

    # bf16 MXU operands, f32 output (recommended production configuration)
    out_bf = feed_forward(x, w1, b1, w2, b2, compute_dtype=jnp.bfloat16)
    jax.block_until_ready(out_bf)
    assert jnp.allclose(out_bf, ref, atol=5e-2, rtol=5e-2), "bf16 mismatch"

    # bf16 activations + bf16 output (exercises the scratch-accumulator path)
    out_bf_io = feed_forward(x.astype(jnp.bfloat16), w1, b1, w2, b2,
                             compute_dtype=jnp.bfloat16)
    jax.block_until_ready(out_bf_io)
    assert jnp.allclose(out_bf_io.astype(jnp.float32), ref,
                        atol=6e-2, rtol=6e-2), "bf16-out mismatch"

    print("KERNEL_OK")
</pallas_src>

<mosaic_0001>
module attributes {stable_mosaic.version = 11 : i64} {
  func.func @_ffn_kernel_out_acc(%arg0: i32, %arg1: i32, %arg2: memref<16x32xf32, #tpu.memory_space<vmem>>, %arg3: memref<32x64xf32, #tpu.memory_space<vmem>>, %arg4: memref<1x64xf32, #tpu.memory_space<vmem>>, %arg5: memref<64x32xf32, #tpu.memory_space<vmem>>, %arg6: memref<1x32xf32, #tpu.memory_space<vmem>>, %arg7: memref<16x32xf32, #tpu.memory_space<vmem>>) attributes {dimension_semantics = [#tpu.dimension_semantics<parallel>, #tpu.dimension_semantics<arbitrary>], iteration_bounds = array<i64: 1, 1>, scalar_prefetch = 0 : i64, scratch_operands = 0 : i64, tpu.core_type = #tpu.core_type<tc>, window_params = [{transform_indices = @transform_0, window_bounds = array<i64: 16, 32>}, {transform_indices = @transform_1, window_bounds = array<i64: 32, 64>}, {transform_indices = @transform_2, window_bounds = array<i64: 1, 64>}, {transform_indices = @transform_3, window_bounds = array<i64: 64, 32>}, {pipeline_mode = #tpu.pipeline_mode<synchronous>, transform_indices = @transform_4, window_bounds = array<i64: 1, 32>}, {transform_indices = @transform_5, window_bounds = array<i64: 16, 32>}]} {
    %c0 = arith.constant 0 : index
    %c0_0 = arith.constant 0 : index
    %0 = vector.load %arg2[%c0, %c0_0] : memref<16x32xf32, #tpu.memory_space<vmem>>, vector<16x32xf32>
    %c0_1 = arith.constant 0 : index
    %c0_2 = arith.constant 0 : index
    %1 = vector.load %arg3[%c0_1, %c0_2] : memref<32x64xf32, #tpu.memory_space<vmem>>, vector<32x64xf32>
    %cst = arith.constant dense<0.000000e+00> : vector<16x64xf32>
    %2 = tpu.matmul %0, %1, %cst {dimension_numbers = #tpu.dot_dimension_numbers<[1], [0], [0], [1], [0, 0, 1, 1], [], []>} : vector<16x32xf32>, vector<32x64xf32>, vector<16x64xf32> -> vector<16x64xf32>
    %c0_3 = arith.constant 0 : index
    %c0_4 = arith.constant 0 : index
    %3 = vector.load %arg4[%c0_3, %c0_4] : memref<1x64xf32, #tpu.memory_space<vmem>>, vector<1x64xf32>
    %4 = vector.broadcast %3 : vector<1x64xf32> to vector<16x64xf32>
    %5 = arith.addf %2, %4 : vector<16x64xf32>
    %cst_5 = arith.constant 0.000000e+00 : f32
    %6 = vector.broadcast %cst_5 : f32 to vector<16x64xf32>
    %7 = arith.maximumf %5, %6 : vector<16x64xf32>
    %c0_6 = arith.constant 0 : index
    %c0_7 = arith.constant 0 : index
    %8 = vector.load %arg5[%c0_6, %c0_7] : memref<64x32xf32, #tpu.memory_space<vmem>>, vector<64x32xf32>
    %cst_8 = arith.constant dense<0.000000e+00> : vector<16x32xf32>
    %9 = tpu.matmul %7, %8, %cst_8 {dimension_numbers = #tpu.dot_dimension_numbers<[1], [0], [0], [1], [0, 0, 1, 1], [], []>} : vector<16x64xf32>, vector<64x32xf32>, vector<16x32xf32> -> vector<16x32xf32>
    %c0_i32 = arith.constant 0 : i32
    %10 = arith.cmpi eq, %arg1, %c0_i32 : i32
    %11 = arith.extui %10 : i1 to i32
    %c0_i32_9 = arith.constant 0 : i32
    %12 = arith.cmpi ne, %11, %c0_i32_9 : i32
    scf.if %12 {
      %c0_19 = arith.constant 0 : index
      %c0_20 = arith.constant 0 : index
      %28 = vector.load %arg7[%c0_19, %c0_20] : memref<16x32xf32, #tpu.memory_space<vmem>>, vector<16x32xf32>
      tpu.vector_store %arg7[%c0_19, %c0_20], %9 {strides = array<i32>} : memref<16x32xf32, #tpu.memory_space<vmem>>, vector<16x32xf32>,
    } else {
    }
    %c0_i32_10 = arith.constant 0 : i32
    %13 = arith.cmpi sgt, %arg1, %c0_i32_10 : i32
    %c0_i32_11 = arith.constant 0 : i32
    %14 = arith.cmpi slt, %arg1, %c0_i32_11 : i32
    %15 = arith.andi %13, %14 : i1
    %16 = arith.extui %15 : i1 to i32
    %c0_i32_12 = arith.constant 0 : i32
    %17 = arith.cmpi ne, %16, %c0_i32_12 : i32
    scf.if %17 {
      %c0_19 = arith.constant 0 : index
      %c0_20 = arith.constant 0 : index
      %28 = vector.load %arg7[%c0_19, %c0_20] : memref<16x32xf32, #tpu.memory_space<vmem>>, vector<16x32xf32>
      %29 = arith.addf %28, %9 : vector<16x32xf32>
      %c0_21 = arith.constant 0 : index
      %c0_22 = arith.constant 0 : index
      %30 = vector.load %arg7[%c0_21, %c0_22] : memref<16x32xf32, #tpu.memory_space<vmem>>, vector<16x32xf32>
      tpu.vector_store %arg7[%c0_21, %c0_22], %29 {strides = array<i32>} : memref<16x32xf32, #tpu.memory_space<vmem>>, vector<16x32xf32>,
    } else {
    }
    %c0_i32_13 = arith.constant 0 : i32
    %18 = arith.cmpi eq, %arg1, %c0_i32_13 : i32
    %c0_i32_14 = arith.constant 0 : i32
    %19 = arith.cmpi sgt, %arg1, %c0_i32_14 : i32
    %20 = arith.andi %18, %19 : i1
    %21 = arith.extui %20 : i1 to i32
    %c0_i32_15 = arith.constant 0 : i32
    %22 = arith.cmpi ne, %21, %c0_i32_15 : i32
    scf.if %22 {
      %c0_19 = arith.constant 0 : index
      %c0_20 = arith.constant 0 : index
      %28 = vector.load %arg7[%c0_19, %c0_20] : memref<16x32xf32, #tpu.memory_space<vmem>>, vector<16x32xf32>
      %c0_21 = arith.constant 0 : index
      %c0_22 = arith.constant 0 : index
      %29 = vector.load %arg6[%c0_21, %c0_22] : memref<1x32xf32, #tpu.memory_space<vmem>>, vector<1x32xf32>
      %30 = vector.broadcast %29 : vector<1x32xf32> to vector<16x32xf32>
      %31 = arith.addf %9, %30 : vector<16x32xf32>
      %32 = arith.addf %28, %31 : vector<16x32xf32>
      %c0_23 = arith.constant 0 : index
      %c0_24 = arith.constant 0 : index
      %33 = vector.load %arg7[%c0_23, %c0_24] : memref<16x32xf32, #tpu.memory_space<vmem>>, vector<16x32xf32>
      tpu.vector_store %arg7[%c0_23, %c0_24], %32 {strides = array<i32>} : memref<16x32xf32, #tpu.memory_space<vmem>>, vector<16x32xf32>,
    } else {
    }
    %c0_i32_16 = arith.constant 0 : i32
    %23 = arith.cmpi eq, %arg1, %c0_i32_16 : i32
    %c0_i32_17 = arith.constant 0 : i32
    %24 = arith.cmpi eq, %arg1, %c0_i32_17 : i32
    %25 = arith.andi %23, %24 : i1
    %26 = arith.extui %25 : i1 to i32
    %c0_i32_18 = arith.constant 0 : i32
    %27 = arith.cmpi ne, %26, %c0_i32_18 : i32
    scf.if %27 {
      %c0_19 = arith.constant 0 : index
      %c0_20 = arith.constant 0 : index
      %28 = vector.load %arg7[%c0_19, %c0_20] : memref<16x32xf32, #tpu.memory_space<vmem>>, vector<16x32xf32>
      %c0_21 = arith.constant 0 : index
      %c0_22 = arith.constant 0 : index
      %29 = vector.load %arg6[%c0_21, %c0_22] : memref<1x32xf32, #tpu.memory_space<vmem>>, vector<1x32xf32>
      %30 = vector.broadcast %29 : vector<1x32xf32> to vector<16x32xf32>
      %31 = arith.addf %28, %30 : vector<16x32xf32>
      %c0_23 = arith.constant 0 : index
      %c0_24 = arith.constant 0 : index
      %32 = vector.load %arg7[%c0_23, %c0_24] : memref<16x32xf32, #tpu.memory_space<vmem>>, vector<16x32xf32>
      tpu.vector_store %arg7[%c0_23, %c0_24], %31 {strides = array<i32>} : memref<16x32xf32, #tpu.memory_space<vmem>>, vector<16x32xf32>,
    } else {
    }
    return
  }
  func.func @transform_0(%arg0: i32, %arg1: i32) -> (i32, i32) {
    %c0_i32 = arith.constant 0 : i32
    %c0_i32_0 = arith.constant 0 : i32
    return %arg0, %c0_i32 : i32, i32
  }
  func.func @transform_1(%arg0: i32, %arg1: i32) -> (i32, i32) {
    %c0_i32 = arith.constant 0 : i32
    %c0_i32_0 = arith.constant 0 : i32
    return %c0_i32, %arg1 : i32, i32
  }
  func.func @transform_2(%arg0: i32, %arg1: i32) -> (i32, i32) {
    %c0_i32 = arith.constant 0 : i32
    %c0_i32_0 = arith.constant 0 : i32
    return %c0_i32, %arg1 : i32, i32
  }
  func.func @transform_3(%arg0: i32, %arg1: i32) -> (i32, i32) {
    %c0_i32 = arith.constant 0 : i32
    %c0_i32_0 = arith.constant 0 : i32
    return %arg1, %c0_i32 : i32, i32
  }
  func.func @transform_4(%arg0: i32, %arg1: i32) -> (i32, i32) {
    %c0_i32 = arith.constant 0 : i32
    %c0_i32_0 = arith.constant 0 : i32
    %c0_i32_1 = arith.constant 0 : i32
    return %c0_i32, %c0_i32_0 : i32, i32
  }
  func.func @transform_5(%arg0: i32, %arg1: i32) -> (i32, i32) {
    %c0_i32 = arith.constant 0 : i32
    %c0_i32_0 = arith.constant 0 : i32
    return %arg0, %c0_i32 : i32, i32
  }
}

</mosaic_0001>

<llo_original>
// kernel: feed_forward.1
$region0: #{feed_forward.1}
  #allocation0 [shape = 'u32[]', space=smem, size = 0x4, offset = 0x4, fixed_abs, tag = 'smem constant byte address 0x4 - core index']
  #allocation1 [shape = 'u32[144,128]{1,0:T(1,128)}', space=vmem, size = 0x12000, scoped, tag = 'internal scratch']
  %s0 = inlined_call_operand.vmem [shape: f32[16,32], index: 0, kind: input, shape index: {}]
  %s1 = inlined_call_operand.vmem [shape: f32[32,64], index: 1, kind: input, shape index: {}]
  %s2 = inlined_call_operand.vmem [shape: f32[1,64], index: 2, kind: input, shape index: {}]
  %s3 = inlined_call_operand.vmem [shape: f32[64,32], index: 3, kind: input, shape index: {}]
  %s4 = inlined_call_operand.vmem [shape: f32[1,32], index: 4, kind: input, shape index: {}]
  %s5 = inlined_call_operand.hbm [shape: f32[16,32], index: 5, kind: output, shape index: {}]
  %s6 = sld [smem:[#allocation0]]
  $region46: #{feed_forward.1} parent=0
    _
  %s8 = ssub.s32 1, %s6
  %s9 = scalar_select 0, %s8, %s6
  $region1: #{feed_forward.1} parent=0
    #allocation2 [shape = 'u8[8192]{0}', space=vmem, size = 0x2000, scoped, tag = 'output window, operand 0, single buffered']
    #allocation3 [shape = 's32[1]{0}', space=sflag, size = 0x4, scoped, tag = 'scoped memory for feed_forward.1']
    %10 = vsyncpa [#allocation3], 0
    // Predicated region
    $region2: #{feed_forward.1} parent=1 // pred_check
      _
    $region3: #{feed_forward.1} parent=1 // pred_check_branch
      %12 = sbr.rel (0) target = $region5
    $region4: #{feed_forward.1} parent=1 // pred_region
      _
    $region5: #{feed_forward.1} parent=1 // pred_fallthru
      _
    // Predicated region
    $region6: #{feed_forward.1} parent=1 // pred_check
      _
    $region7: #{feed_forward.1} parent=1 // pred_check_branch
      %14 = sbr.rel (0) target = $region9
    $region8: #{feed_forward.1} parent=1 // pred_region
      _
    $region9: #{feed_forward.1} parent=1 // pred_fallthru
      _
    // Predicated region
    $region10: #{feed_forward.1} parent=1 // pred_check
      _
    $region11: #{feed_forward.1} parent=1 // pred_check_branch
      %16 = sbr.rel (0) target = $region13
    $region12: #{feed_forward.1} parent=1 // pred_region
      _
    $region13: #{feed_forward.1} parent=1 // pred_fallthru
      _
    // Predicated region
    $region14: #{feed_forward.1} parent=1 // pred_check
      _
    $region15: #{feed_forward.1} parent=1 // pred_check_branch
      %18 = sbr.rel (0) target = $region17
    $region16: #{feed_forward.1} parent=1 // pred_region
      _
    $region17: #{feed_forward.1} parent=1 // pred_fallthru
      _
    // Predicated region
    $region18: #{feed_forward.1} parent=1 // pred_check
      _
    $region19: #{feed_forward.1} parent=1 // pred_check_branch
      %20 = sbr.rel (0) target = $region21
    $region20: #{feed_forward.1} parent=1 // pred_region
      _
    $region21: #{feed_forward.1} parent=1 // pred_fallthru
      _
    %v21 = vld [vmem:[%s0] sm:$0xff]
    %v22 = vld [vmem:[%s0 + $0x8] sm:$0xff]
    %v23 = vld [vmem:[%s1] sm:$0xff]
    %v24 = vld [vmem:[%s1 + $0x8] sm:$0xff]
    %v25 = vld [vmem:[%s1 + $0x10] sm:$0xff]
    %v26 = vld [vmem:[%s1 + $0x18] sm:$0xff]
    %v27 = vld [vmem:[%s2] sm:$0x1]
    %v29 = vlaneseq
    %v30 = vshrl.u32 %v29, 7
    %v31 = vsub.s32 0, %v30
    %v32 = vrot.slane %v27, %v31
    %vm34 = vcmask 261120
    %v36 = vsel %vm34, %v21, 0
    %v39 = vsel %vm34, %v22, 0
    %41 = vmatprep.subr.mxu0 0.0
    %42 = vmatpush1.msra.mxu0 %v23
    %43 = vmatprep.subr.mxu0 0.0
    %44 = vmatpush1.msra.mxu0 %v24
    %45 = vmatprep.subr.mxu0 0.0
    %46 = vmatpush1.msra.mxu0 %v25
    %47 = vmatprep.subr.mxu0 0.0
    %48 = vmatpush1.msra.mxu0 %v26
    %49 = vmatprep.subr.mxu0 0.0
    %50 = vmatpush1.msra.mxu0 0.0
    %51 = vmatprep.subr.mxu0 0.0
    %52 = vmatpush1.msra.mxu0 0.0
    %53 = vmatprep.subr.mxu0 0.0
    %54 = vmatpush1.msra.mxu0 0.0
    %55 = vmatprep.subr.mxu0 0.0
    %56 = vmatpush1.msra.mxu0 0.0
    %57 = vmatprep.subr.mxu0 0.0
    %58 = vmatpush1.msra.mxu0 0.0
    %59 = vmatprep.subr.mxu0 0.0
    %60 = vmatpush1.msra.mxu0 0.0
    %61 = vmatprep.subr.mxu0 0.0
    %62 = vmatpush1.msra.mxu0 0.0
    %63 = vmatprep.subr.mxu0 0.0
    %64 = vmatpush1.msra.mxu0 0.0
    %65 = vmatprep.subr.mxu0 0.0
    %66 = vmatpush1.msra.mxu0 0.0
    %67 = vmatprep.subr.mxu0 0.0
    %68 = vmatpush1.msra.mxu0 0.0
    %69 = vmatprep.subr.mxu0 0.0
    %70 = vmatpush1.msra.mxu0 0.0
    %71 = vmatprep.subr.mxu0 0.0
    %72 = vmatpush1.msra.mxu0 0.0
    %73 = vmatprep.subr.mxu0 0.0
    %74 = vmatpush1.msra.mxu0 0.0
    %75 = vmatprep.subr.mxu0 0.0
    %76 = vmatpush1.msra.mxu0 0.0
    %77 = vmatprep.subr.mxu0 0.0
    %78 = vmatpush1.msra.mxu0 0.0
    %79 = vmatprep.subr.mxu0 0.0
    %80 = vmatpush1.msra.mxu0 0.0
    %81 = vmatprep.subr.mxu0 0.0
    %82 = vmatpush1.msra.mxu0 0.0
    %83 = vmatprep.subr.mxu0 0.0
    %84 = vmatpush1.msra.mxu0 0.0
    %85 = vmatprep.subr.mxu0 0.0
    %86 = vmatpush1.msra.mxu0 0.0
    %87 = vmatprep.subr.mxu0 0.0
    %88 = vmatpush1.msra.mxu0 0.0
    %89 = vmatprep.subr.mxu0 0.0
    %90 = vmatpush1.msra.mxu0 0.0
    %91 = vmatprep.subr.mxu0 0.0
    %92 = vmatpush1.msra.mxu0 0.0
    %93 = vmatprep.subr.mxu0 0.0
    %94 = vmatpush1.msra.mxu0 0.0
    %95 = vmatprep.subr.mxu0 0.0
    %96 = vmatpush1.msra.mxu0 0.0
    %97 = vmatprep.subr.mxu0 0.0
    %98 = vmatpush1.msra.mxu0 0.0
    %99 = vmatprep.subr.mxu0 0.0
    %100 = vmatpush1.msra.mxu0 0.0
    %101 = vmatprep.subr.mxu0 0.0
    %102 = vmatpush1.msra.mxu0 0.0
    %103 = vmatprep.subr.mxu0 0.0
    %104 = vmatpush1.msra.mxu0 0.0
    %105 = vmatprep.mubr.f32.mxu0 0.0
    %106 = vmatmul.mubr.f32.gmra.mrb[0].mxu0 %v36
    %v107 = vpop.f32.mrb[0].mxu0
    %v108 = vadd.f32 %v32, %v107
    %v109 = vpop.f32.mrb[0].mxu0
    %110 = vmatprep.mubr.f32.mxu0 0.0
    %111 = vmatmul.mubr.f32.gmra.mrb[0].mxu0 %v39
    %v112 = vpop.f32.mrb[0].mxu0
    %v113 = vadd.f32 %v32, %v112
    %v114 = vpop.f32.mrb[0].mxu0
    %115 = vdwg.mxu0
    %v116 = vmax.f32 %v108, 0.0
    %v117 = vmax.f32 %v113, 0.0
    %v118 = vld [vmem:[%s3] sm:$0xff]
    %v119 = vld [vmem:[%s3 + $0x8] sm:$0xff]
    %v120 = vld [vmem:[%s3 + $0x10] sm:$0xff]
    %v121 = vld [vmem:[%s3 + $0x18] sm:$0xff]
    %v122 = vld [vmem:[%s3 + $0x20] sm:$0xff]
    %v123 = vld [vmem:[%s3 + $0x28] sm:$0xff]
    %v124 = vld [vmem:[%s3 + $0x30] sm:$0xff]
    %v125 = vld [vmem:[%s3 + $0x38] sm:$0xff]
    %vm126 = vcmask 523264
    %v128 = vsel %vm126, %v116, 0
    %v131 = vsel %vm126, %v117, 0
    %133 = vmatprep.subr.mxu0 0.0
    %134 = vmatpush1.msra.mxu0 %v118
    %135 = vmatprep.subr.mxu0 0.0
    %136 = vmatpush1.msra.mxu0 %v119
    %137 = vmatprep.subr.mxu0 0.0
    %138 = vmatpush1.msra.mxu0 %v120
    %139 = vmatprep.subr.mxu0 0.0
    %140 = vmatpush1.msra.mxu0 %v121
    %141 = vmatprep.subr.mxu0 0.0
    %142 = vmatpush1.msra.mxu0 %v122
    %143 = vmatprep.subr.mxu0 0.0
    %144 = vmatpush1.msra.mxu0 %v123
    %145 = vmatprep.subr.mxu0 0.0
    %146 = vmatpush1.msra.mxu0 %v124
    %147 = vmatprep.subr.mxu0 0.0
    %148 = vmatpush1.msra.mxu0 %v125
    %149 = vmatprep.subr.mxu0 0.0
    %150 = vmatpush1.msra.mxu0 0.0
    %151 = vmatprep.subr.mxu0 0.0
    %152 = vmatpush1.msra.mxu0 0.0
    %153 = vmatprep.subr.mxu0 0.0
    %154 = vmatpush1.msra.mxu0 0.0
    %155 = vmatprep.subr.mxu0 0.0
    %156 = vmatpush1.msra.mxu0 0.0
    %157 = vmatprep.subr.mxu0 0.0
    %158 = vmatpush1.msra.mxu0 0.0
    %159 = vmatprep.subr.mxu0 0.0
    %160 = vmatpush1.msra.mxu0 0.0
    %161 = vmatprep.subr.mxu0 0.0
    %162 = vmatpush1.msra.mxu0 0.0
    %163 = vmatprep.subr.mxu0 0.0
    %164 = vmatpush1.msra.mxu0 0.0
    %165 = vmatprep.subr.mxu0 0.0
    %166 = vmatpush1.msra.mxu0 0.0
    %167 = vmatprep.subr.mxu0 0.0
    %168 = vmatpush1.msra.mxu0 0.0
    %169 = vmatprep.subr.mxu0 0.0
    %170 = vmatpush1.msra.mxu0 0.0
    %171 = vmatprep.subr.mxu0 0.0
    %172 = vmatpush1.msra.mxu0 0.0
    %173 = vmatprep.subr.mxu0 0.0
    %174 = vmatpush1.msra.mxu0 0.0
    %175 = vmatprep.subr.mxu0 0.0
    %176 = vmatpush1.msra.mxu0 0.0
    %177 = vmatprep.subr.mxu0 0.0
    %178 = vmatpush1.msra.mxu0 0.0
    %179 = vmatprep.subr.mxu0 0.0
    %180 = vmatpush1.msra.mxu0 0.0
    %181 = vmatprep.subr.mxu0 0.0
    %182 = vmatpush1.msra.mxu0 0.0
    %183 = vmatprep.subr.mxu0 0.0
    %184 = vmatpush1.msra.mxu0 0.0
    %185 = vmatprep.subr.mxu0 0.0
    %186 = vmatpush1.msra.mxu0 0.0
    %187 = vmatprep.subr.mxu0 0.0
    %188 = vmatpush1.msra.mxu0 0.0
    %189 = vmatprep.subr.mxu0 0.0
    %190 = vmatpush1.msra.mxu0 0.0
    %191 = vmatprep.subr.mxu0 0.0
    %192 = vmatpush1.msra.mxu0 0.0
    %193 = vmatprep.subr.mxu0 0.0
    %194 = vmatpush1.msra.mxu0 0.0
    %195 = vmatprep.subr.mxu0 0.0
    %196 = vmatpush1.msra.mxu0 0.0
    %197 = vmatprep.mubr.f32.mxu0 0.0
    %198 = vmatmul.mubr.f32.gmra.mrb[0].mxu0 %v128
    %v199 = vpop.f32.mrb[0].mxu0
    %v200 = vadd.f32 0.0, %v199
    %v201 = vpop.f32.mrb[0].mxu0
    %202 = vmatprep.mubr.f32.mxu0 0.0
    %203 = vmatmul.mubr.f32.gmra.mrb[0].mxu0 %v131
    %v204 = vpop.f32.mrb[0].mxu0
    %v205 = vadd.f32 0.0, %v204
    %v206 = vpop.f32.mrb[0].mxu0
    %207 = vdwg.mxu0
    %p208 = scmp.eq.s32.totalorder 0, 0
    // Predicated region
    $region22: #{feed_forward.1} parent=1 // pred_check
      %p209 = pneg %p208
    $region23: #{feed_forward.1} parent=1 // pred_check_branch
      %211 = sbr.rel (%p209) target = $region25
    $region24: #{feed_forward.1} parent=1 // pred_region
      %212 = vst.msk [vmem:[#allocation2] sm:$0xff] %vm34, %v200
      %213 = vst.msk [vmem:[#allocation2 + $0x8] sm:$0xff] %vm34, %v205
    $region25: #{feed_forward.1} parent=1 // pred_fallthru
      _
    %p214 = scmp.gt.s32.totalorder 0, 0
    %p215 = scmp.lt.s32.totalorder 0, 0
    %p216 = pnand %p214, %p215
    %p217 = pneg %p216
    // Predicated region
    $region26: #{feed_forward.1} parent=1 // pred_check
      _
    $region27: #{feed_forward.1} parent=1 // pred_check_branch
      %219 = sbr.rel (%p216) target = $region29
    $region28: #{feed_forward.1} parent=1 // pred_region
      %v220 = vld [vmem:[#allocation2] sm:$0xff]
      %v221 = vld [vmem:[#allocation2 + $0x8] sm:$0xff]
      %v222 = vadd.f32 %v220, %v200
      %v223 = vadd.f32 %v221, %v205
      %224 = vst.msk [vmem:[#allocation2] sm:$0xff] %vm34, %v222
      %225 = vst.msk [vmem:[#allocation2 + $0x8] sm:$0xff] %vm34, %v223
    $region29: #{feed_forward.1} parent=1 // pred_fallthru
      _
    %p226 = pnand %p208, %p214
    %p227 = pneg %p226
    // Predicated region
    $region30: #{feed_forward.1} parent=1 // pred_check
      _
    $region31: #{feed_forward.1} parent=1 // pred_check_branch
      %229 = sbr.rel (%p226) target = $region33
    $region32: #{feed_forward.1} parent=1 // pred_region
      %v230 = vld [vmem:[#allocation2] sm:$0xff]
      %v231 = vld [vmem:[#allocation2 + $0x8] sm:$0xff]
      %v232 = vld [vmem:[%s4] sm:$0x1]
      %v234 = vlaneseq
      %v235 = vshrl.u32 %v234, 7
      %v236 = vsub.s32 0, %v235
      %v237 = vrot.slane %v232, %v236
      %v239 = vadd.f32 %v200, %v237
      %v240 = vadd.f32 %v205, %v237
      %v241 = vadd.f32 %v230, %v239
      %v242 = vadd.f32 %v231, %v240
      %243 = vst.msk [vmem:[#allocation2] sm:$0xff] %vm34, %v241
      %244 = vst.msk [vmem:[#allocation2 + $0x8] sm:$0xff] %vm34, %v242
    $region33: #{feed_forward.1} parent=1 // pred_fallthru
      _
    // Predicated region
    $region34: #{feed_forward.1} parent=1 // pred_check
      %p245 = pneg %p208
    $region35: #{feed_forward.1} parent=1 // pred_check_branch
      %247 = sbr.rel (%p245) target = $region37
    $region36: #{feed_forward.1} parent=1 // pred_region
      %v248 = vld [vmem:[#allocation2] sm:$0xff]
      %v249 = vld [vmem:[#allocation2 + $0x8] sm:$0xff]
      %v250 = vld [vmem:[%s4] sm:$0x1]
      %v252 = vlaneseq
      %v253 = vshrl.u32 %v252, 7
      %v254 = vsub.s32 0, %v253
      %v255 = vrot.slane %v250, %v254
      %v257 = vadd.f32 %v248, %v255
      %v258 = vadd.f32 %v249, %v255
      %259 = vst.msk [vmem:[#allocation2] sm:$0xff] %vm34, %v257
      %260 = vst.msk [vmem:[#allocation2 + $0x8] sm:$0xff] %vm34, %v258
    $region37: #{feed_forward.1} parent=1 // pred_fallthru
      _
    // Predicated region
    $region38: #{feed_forward.1} parent=1 // pred_check
      _
    $region39: #{feed_forward.1} parent=1 // pred_check_branch
      %262 = sbr.rel (0) target = $region41
    $region40: #{feed_forward.1} parent=1 // pred_region
      %s264 = ssub.s32 256, 256
      %265 = vsyncadd [#allocation3], %s264
      %s266 = sshll.u32 [#allocation2], 4
      %s267 = int_to_ptr.vmem [resolvable:$true] %s266
      %272 = dma.vmem_to_hbm [thread:$0]  %s267, 256, %s5, [#allocation3], 128, 128, 8
    $region41: #{feed_forward.1} parent=1 // pred_fallthru
      _
    // Predicated region
    $region42: #{feed_forward.1} parent=1 // pred_check
      _
    $region43: #{feed_forward.1} parent=1 // pred_check_branch
      %274 = sbr.rel (0) target = $region45
    $region44: #{feed_forward.1} parent=1 // pred_region
      %275 = dma.done [#allocation3], 256
    $region45: #{feed_forward.1} parent=1 // pred_fallthru
      _
    %276 = vsyncpa [#allocation3], 1

</llo_original>
